<compile_context>
chip_gen: v6e
topology: v6e:2x2x1
jax: 0.10.0
libtpu: 0.0.40
codegen_flags: <defaults>
</compile_context>

<pallas_src>
import numpy as np
import jax
import jax.numpy as jnp
from jax.experimental import pallas as pl
from jax.experimental.pallas import tpu as pltpu


# ----------------------------------------------------------------------------
# Model geometry
# ----------------------------------------------------------------------------
N_BATCH, C_IN, H_IN, W_IN = 2, 4, 16, 16
C1, C2 = 8, 16
W2 = W_IN // 2                   # conv2 spatial width (8)
HF, WF = H_IN // 4, W_IN // 4    # final feature map (4, 4)
D1, D2, D3, OUT = 256, 128, 64, 41
OUT_PAD = 128                    # lane-dense output slab; sliced to OUT outside

ROWS = H_IN * N_BATCH            # 32 slab rows, r = h*N + n
LANES0 = W_IN * C_IN             # 64   conv1 input lanes  (w, cin)
LANES1 = W_IN * C1               # 128  conv1 output lanes (w, c1)
LANES2 = W2 * C2                 # 128  conv2 output lanes (w2, c2)
FLAT = HF * LANES2               # 512  flattened classifier-input lanes


# ----------------------------------------------------------------------------
# Fused Pallas kernel (everything VMEM-resident, all values, no scratch)
# ----------------------------------------------------------------------------
def vgg_fused_kernel(x_ref, a1_ref, b1_ref, a2_ref, b2_ref,
                     f1w_ref, f1b_ref, f2w_ref, f2b_ref, f3w_ref, f3b_ref,
                     o_ref):
    f32 = jnp.float32
    N = N_BATCH

    def shift_rows(x, s):
        # y[r, :] = x[r + s, :], zero-filled outside [0, rows).  The zero fill
        # realizes the conv's h-direction padding; done on values (no scratch).
        fill = jnp.zeros((abs(s), x.shape[1]), x.dtype)
        if s > 0:
            return jnp.concatenate([x[s:, :], fill], axis=0)
        return jnp.concatenate([fill, x[:s, :]], axis=0)

    def shift_lanes(x, s):
        # y[:, l] = x[:, l + s], zero-filled at the high end (s > 0 only).
        fill = jnp.zeros((x.shape[0], s), x.dtype)
        return jnp.concatenate([x[:, s:], fill], axis=1)

    x0 = x_ref[...]                                              # (32, 64)

    # conv1 + ReLU: dh = +-1 in h -> row shifts by +-N; the dw taps and the
    # cin contraction are folded into the Toeplitz-expanded A1.  One 2-D dot.
    xk = jnp.concatenate(
        [shift_rows(x0, -N), x0, shift_rows(x0, N)], axis=1)     # (32, 192)
    y1 = jnp.dot(xk, a1_ref[...], preferred_element_type=f32)
    y1 = jnp.maximum(y1 + b1_ref[...], 0.0)                      # (32, 128)

    # maxpool1 (2x2/2), compaction deferred: results valid at even-h rows and
    # even-w lane blocks; invalid slots are never referenced by A2.
    m = jnp.maximum(y1, shift_rows(y1, N))
    m1 = jnp.maximum(m, shift_lanes(m, C1))                      # (32, 128)

    # conv2 + ReLU: dh = +-1 in h2 -> +-2N rows; dw, c1 contraction and the
    # pool1 even-w selection are folded into A2.
    mk = jnp.concatenate(
        [shift_rows(m1, -2 * N), m1, shift_rows(m1, 2 * N)], axis=1)  # (32, 384)
    y2 = jnp.dot(mk, a2_ref[...], preferred_element_type=f32)
    y2 = jnp.maximum(y2 + b2_ref[...], 0.0)                      # (32, 128)

    # maxpool2 (2x2/2), compaction deferred again.
    m = jnp.maximum(y2, shift_rows(y2, 2 * N))
    m2 = jnp.maximum(m, shift_lanes(m, C2))                      # (32, 128)

    # flatten: valid rows are r = 4*N*hf + n, so the N-row slices below are
    # sublane-aligned; concat along lanes -> (N, 512).  The torch NCHW flatten
    # permutation + pool2 even-w selection live in the expanded fc1 weight.
    xc = jnp.concatenate(
        [m2[4 * N * hf:4 * N * hf + N, :] for hf in range(HF)], axis=1)  # (2, 512)

    # classifier: Linear->ReLU->(Dropout=id)->Linear->ReLU->(Dropout=id)->Linear
    h = jnp.dot(xc, f1w_ref[...], preferred_element_type=f32)
    h = jnp.maximum(h + f1b_ref[...], 0.0)                       # (2, 128)
    h = jnp.dot(h, f2w_ref[...], preferred_element_type=f32)
    h = jnp.maximum(h + f2b_ref[...], 0.0)                       # (2, 64)
    z = jnp.dot(h, f3w_ref[...], preferred_element_type=f32) + f3b_ref[...]
    o_ref[...] = z.astype(o_ref.dtype)                           # (2, 128) lane-dense


# ----------------------------------------------------------------------------
# Offline parameter packing (one-time re-layout, plain numpy)
# ----------------------------------------------------------------------------
def pack_params(params):
    """Re-layout PyTorch-style params into the fused kernel's lane-dense layout:
    Toeplitz-expanded conv weights (dw + cin folded), pool selections folded,
    flatten permutation folded into fc1, tiled biases, fc3 padded to 128."""
    w1 = np.asarray(params["conv1_w"])          # (3, 3, Cin, C1) HWIO
    w2 = np.asarray(params["conv2_w"])          # (3, 3, C1, C2)
    f1 = np.asarray(params["fc1_w"])            # (256, 128)

    # conv1: A1[(kh, w_in, cin), (w_out, c1)] = w1[kh, kw, cin, c1], kw = w_in - w_out + 1
    a1 = np.zeros((3 * LANES0, LANES1), np.float32)
    for kh in range(3):
        for kw in range(3):
            for wo in range(W_IN):
                wi = wo + kw - 1
                if 0 <= wi < W_IN:
                    a1[kh * LANES0 + wi * C_IN:kh * LANES0 + (wi + 1) * C_IN,
                       wo * C1:(wo + 1) * C1] = w1[kh, kw]

    # conv2: input is the *uncompacted* pool1 slab (lane = w*C1 + c1, valid at
    # even w = 2*w_in); only those rows of A2 are non-zero.
    a2 = np.zeros((3 * LANES1, LANES2), np.float32)
    for kh in range(3):
        for kw in range(3):
            for wo in range(W2):
                wi = wo + kw - 1
                if 0 <= wi < W2:
                    a2[kh * LANES1 + (2 * wi) * C1:kh * LANES1 + (2 * wi + 1) * C1,
                       wo * C2:(wo + 1) * C2] = w2[kh, kw]

    # fc1: fold torch's NCHW flatten order + the pool2 even-w selection.
    #   kernel lane : hf*LANES2 + (2*wf)*C2 + c
    #   torch index : c*(HF*WF) + hf*WF + wf
    b1w = np.zeros((FLAT, D2), np.float32)
    for hf in range(HF):
        for wf in range(WF):
            for c in range(C2):
                b1w[hf * LANES2 + (2 * wf) * C2 + c] = f1[c * (HF * WF) + hf * WF + wf]

    # biases tiled to lane-dense rows; fc3 zero-padded to a 128-lane output slab
    b1t = np.tile(np.asarray(params["conv1_b"]), (1, W_IN)).astype(np.float32)
    b2t = np.tile(np.asarray(params["conv2_b"]), (1, W2)).astype(np.float32)
    f3w = np.zeros((D3, OUT_PAD), np.float32)
    f3w[:, :OUT] = np.asarray(params["fc3_w"])
    f3b = np.zeros((1, OUT_PAD), np.float32)
    f3b[:, :OUT] = np.asarray(params["fc3_b"])

    packed = dict(a1=a1, b1=b1t, a2=a2, b2=b2t,
                  f1w=b1w, f1b=params["fc1_b"],
                  f2w=params["fc2_w"], f2b=params["fc2_b"],
                  f3w=f3w, f3b=f3b)
    return {k: jnp.asarray(v, jnp.float32) for k, v in packed.items()}


# ----------------------------------------------------------------------------
# Wrapper
# ----------------------------------------------------------------------------
_VMEM = pl.BlockSpec(memory_space=pltpu.MemorySpace.VMEM)


def vgg_forward(x_nchw, packed):
    """Full forward pass; input is PyTorch-style NCHW, params from pack_params."""
    N, Cin, H, W = x_nchw.shape
    # Single wrapper-side relayout: NCHW -> rows=(h, n), lanes=(w, cin).
    # All other layout plumbing is folded into the packed weights offline.
    x_slab = jnp.transpose(x_nchw, (2, 0, 3, 1)).reshape(H * N, W * Cin)
    x_slab = x_slab.astype(jnp.float32)

    out = pl.pallas_call(
        vgg_fused_kernel,
        out_shape=jax.ShapeDtypeStruct((N, OUT_PAD), jnp.float32),
        in_specs=[_VMEM] * 11,
        out_specs=_VMEM,
        # N=2: grid-less, single TensorCore.  For real batch sizes add a grid
        # over (h, n) row-chunks with dimension_semantics=("parallel",) so the
        # second TensorCore on v7x is engaged.
    )(x_slab, packed["a1"], packed["b1"], packed["a2"], packed["b2"],
      packed["f1w"], packed["f1b"], packed["f2w"], packed["f2b"],
      packed["f3w"], packed["f3b"])
    return out[:, :OUT]


# ----------------------------------------------------------------------------
# Deterministic parameter init (matches _initialize_weights distributions)
# ----------------------------------------------------------------------------
def init_params(key):
    ks = jax.random.split(key, 5)

    def kaiming_conv(k, kh, kw, cin, cout):
        fan_out = cout * kh * kw
        std = (2.0 / fan_out) ** 0.5
        return jax.random.normal(k, (kh, kw, cin, cout), jnp.float32) * std

    return {
        # Conv2d: kaiming_normal_(mode='fan_out', relu), bias = 0
        "conv1_w": kaiming_conv(ks[0], 3, 3, C_IN, C1),
        "conv1_b": jnp.zeros((1, C1), jnp.float32),
        "conv2_w": kaiming_conv(ks[1], 3, 3, C1, C2),
        "conv2_b": jnp.zeros((1, C2), jnp.float32),
        # Linear: normal(0, 0.01), bias = 0.  Stored as (in, out) for x @ W.
        "fc1_w": jax.random.normal(ks[2], (D1, D2), jnp.float32) * 0.01,
        "fc1_b": jnp.zeros((1, D2), jnp.float32),
        "fc2_w": jax.random.normal(ks[3], (D2, D3), jnp.float32) * 0.01,
        "fc2_b": jnp.zeros((1, D3), jnp.float32),
        "fc3_w": jax.random.normal(ks[4], (D3, OUT), jnp.float32) * 0.01,
        "fc3_b": jnp.zeros((1, OUT), jnp.float32),
    }


# ----------------------------------------------------------------------------
# Pure-JAX reference (correctness check, uses the original un-packed params)
# ----------------------------------------------------------------------------
def vgg_reference(x_nchw, p):
    x = jnp.transpose(x_nchw, (0, 2, 3, 1)).astype(jnp.float32)  # NHWC

    def conv(x, w, b):
        y = jax.lax.conv_general_dilated(
            x, w, window_strides=(1, 1), padding="SAME",
            dimension_numbers=("NHWC", "HWIO", "NHWC"))
        return jax.nn.relu(y + b)

    def pool(x):
        return jax.lax.reduce_window(x, -jnp.inf, jax.lax.max,
                                     (1, 2, 2, 1), (1, 2, 2, 1), "VALID")

    x = pool(conv(x, p["conv1_w"], p["conv1_b"]))
    x = pool(conv(x, p["conv2_w"], p["conv2_b"]))
    x = jnp.transpose(x, (0, 3, 1, 2)).reshape(x.shape[0], -1)   # NCHW flatten
    h = jax.nn.relu(x @ p["fc1_w"] + p["fc1_b"])
    h = jax.nn.relu(h @ p["fc2_w"] + p["fc2_b"])
    return h @ p["fc3_w"] + p["fc3_b"]


if __name__ == "__main__":
    key = jax.random.PRNGKey(0)
    k_x, k_p = jax.random.split(key)

    x = jax.random.normal(k_x, (N_BATCH, C_IN, H_IN, W_IN), jnp.float32)
    params = init_params(k_p)
    packed = pack_params(params)          # one-time offline re-layout

    out = jax.block_until_ready(vgg_forward(x, packed))
    assert out.shape == (N_BATCH, OUT), out.shape

    ref = jax.block_until_ready(vgg_reference(x, params))
    assert jnp.allclose(out, ref, atol=1e-4, rtol=1e-4), (
        float(jnp.max(jnp.abs(out - ref))))

    print("KERNEL_OK")
</pallas_src>

<mosaic_0001>
module attributes {stable_mosaic.version = 11 : i64} {
  func.func @vgg_fused_kernel(%arg0: memref<32x64xf32, #tpu.memory_space<vmem>>, %arg1: memref<192x128xf32, #tpu.memory_space<vmem>>, %arg2: memref<1x128xf32, #tpu.memory_space<vmem>>, %arg3: memref<384x128xf32, #tpu.memory_space<vmem>>, %arg4: memref<1x128xf32, #tpu.memory_space<vmem>>, %arg5: memref<512x128xf32, #tpu.memory_space<vmem>>, %arg6: memref<1x128xf32, #tpu.memory_space<vmem>>, %arg7: memref<128x64xf32, #tpu.memory_space<vmem>>, %arg8: memref<1x64xf32, #tpu.memory_space<vmem>>, %arg9: memref<64x128xf32, #tpu.memory_space<vmem>>, %arg10: memref<1x128xf32, #tpu.memory_space<vmem>>, %arg11: memref<2x128xf32, #tpu.memory_space<vmem>>) attributes {dimension_semantics = [], scalar_prefetch = 0 : i64, scratch_operands = 0 : i64, tpu.core_type = #tpu.core_type<tc>} {
    %c0 = arith.constant 0 : index
    %c0_0 = arith.constant 0 : index
    %0 = vector.load %arg0[%c0, %c0_0] : memref<32x64xf32, #tpu.memory_space<vmem>>, vector<32x64xf32>
    %cst = arith.constant 0.000000e+00 : f32
    %1 = vector.broadcast %cst : f32 to vector<2x64xf32>
    %2 = vector.extract_strided_slice %0 {offsets = [0, 0], sizes = [30, 64], strides = [1, 1]} : vector<32x64xf32> to vector<30x64xf32>
    %3 = tpu.concatenate %1, %2 in 0 : vector<2x64xf32>, vector<30x64xf32> -> vector<32x64xf32>
    %cst_1 = arith.constant 0.000000e+00 : f32
    %4 = vector.broadcast %cst_1 : f32 to vector<2x64xf32>
    %5 = vector.extract_strided_slice %0 {offsets = [2, 0], sizes = [30, 64], strides = [1, 1]} : vector<32x64xf32> to vector<30x64xf32>
    %6 = tpu.concatenate %5, %4 in 0 : vector<30x64xf32>, vector<2x64xf32> -> vector<32x64xf32>
    %7 = tpu.concatenate %3, %0, %6 in 1 : vector<32x64xf32>, vector<32x64xf32>, vector<32x64xf32> -> vector<32x192xf32>
    %c0_2 = arith.constant 0 : index
    %c0_3 = arith.constant 0 : index
    %8 = vector.load %arg1[%c0_2, %c0_3] : memref<192x128xf32, #tpu.memory_space<vmem>>, vector<192x128xf32>
    %cst_4 = arith.constant dense<0.000000e+00> : vector<32x128xf32>
    %9 = tpu.matmul %7, %8, %cst_4 {dimension_numbers = #tpu.dot_dimension_numbers<[1], [0], [0], [1], [0, 0, 1, 1], [], []>} : vector<32x192xf32>, vector<192x128xf32>, vector<32x128xf32> -> vector<32x128xf32>
    %c0_5 = arith.constant 0 : index
    %c0_6 = arith.constant 0 : index
    %10 = vector.load %arg2[%c0_5, %c0_6] : memref<1x128xf32, #tpu.memory_space<vmem>>, vector<1x128xf32>
    %11 = vector.broadcast %10 : vector<1x128xf32> to vector<32x128xf32>
    %12 = arith.addf %9, %11 : vector<32x128xf32>
    %cst_7 = arith.constant 0.000000e+00 : f32
    %13 = vector.broadcast %cst_7 : f32 to vector<32x128xf32>
    %14 = arith.maximumf %12, %13 : vector<32x128xf32>
    %cst_8 = arith.constant 0.000000e+00 : f32
    %15 = vector.broadcast %cst_8 : f32 to vector<2x128xf32>
    %16 = vector.extract_strided_slice %14 {offsets = [2, 0], sizes = [30, 128], strides = [1, 1]} : vector<32x128xf32> to vector<30x128xf32>
    %17 = tpu.concatenate %16, %15 in 0 : vector<30x128xf32>, vector<2x128xf32> -> vector<32x128xf32>
    %18 = arith.maximumf %14, %17 : vector<32x128xf32>
    %cst_9 = arith.constant 0.000000e+00 : f32
    %19 = vector.broadcast %cst_9 : f32 to vector<32x8xf32>
    %20 = vector.extract_strided_slice %18 {offsets = [0, 8], sizes = [32, 120], strides = [1, 1]} : vector<32x128xf32> to vector<32x120xf32>
    %21 = tpu.concatenate %20, %19 in 1 : vector<32x120xf32>, vector<32x8xf32> -> vector<32x128xf32>
    %22 = arith.maximumf %18, %21 : vector<32x128xf32>
    %cst_10 = arith.constant 0.000000e+00 : f32
    %23 = vector.broadcast %cst_10 : f32 to vector<4x128xf32>
    %24 = vector.extract_strided_slice %22 {offsets = [0, 0], sizes = [28, 128], strides = [1, 1]} : vector<32x128xf32> to vector<28x128xf32>
    %25 = tpu.concatenate %23, %24 in 0 : vector<4x128xf32>, vector<28x128xf32> -> vector<32x128xf32>
    %cst_11 = arith.constant 0.000000e+00 : f32
    %26 = vector.broadcast %cst_11 : f32 to vector<4x128xf32>
    %27 = vector.extract_strided_slice %22 {offsets = [4, 0], sizes = [28, 128], strides = [1, 1]} : vector<32x128xf32> to vector<28x128xf32>
    %28 = tpu.concatenate %27, %26 in 0 : vector<28x128xf32>, vector<4x128xf32> -> vector<32x128xf32>
    %29 = tpu.concatenate %25, %22, %28 in 1 : vector<32x128xf32>, vector<32x128xf32>, vector<32x128xf32> -> vector<32x384xf32>
    %c0_12 = arith.constant 0 : index
    %c0_13 = arith.constant 0 : index
    %30 = vector.load %arg3[%c0_12, %c0_13] : memref<384x128xf32, #tpu.memory_space<vmem>>, vector<384x128xf32>
    %cst_14 = arith.constant dense<0.000000e+00> : vector<32x128xf32>
    %31 = tpu.matmul %29, %30, %cst_14 {dimension_numbers = #tpu.dot_dimension_numbers<[1], [0], [0], [1], [0, 0, 1, 1], [], []>} : vector<32x384xf32>, vector<384x128xf32>, vector<32x128xf32> -> vector<32x128xf32>
    %c0_15 = arith.constant 0 : index
    %c0_16 = arith.constant 0 : index
    %32 = vector.load %arg4[%c0_15, %c0_16] : memref<1x128xf32, #tpu.memory_space<vmem>>, vector<1x128xf32>
    %33 = vector.broadcast %32 : vector<1x128xf32> to vector<32x128xf32>
    %34 = arith.addf %31, %33 : vector<32x128xf32>
    %cst_17 = arith.constant 0.000000e+00 : f32
    %35 = vector.broadcast %cst_17 : f32 to vector<32x128xf32>
    %36 = arith.maximumf %34, %35 : vector<32x128xf32>
    %cst_18 = arith.constant 0.000000e+00 : f32
    %37 = vector.broadcast %cst_18 : f32 to vector<4x128xf32>
    %38 = vector.extract_strided_slice %36 {offsets = [4, 0], sizes = [28, 128], strides = [1, 1]} : vector<32x128xf32> to vector<28x128xf32>
    %39 = tpu.concatenate %38, %37 in 0 : vector<28x128xf32>, vector<4x128xf32> -> vector<32x128xf32>
    %40 = arith.maximumf %36, %39 : vector<32x128xf32>
    %cst_19 = arith.constant 0.000000e+00 : f32
    %41 = vector.broadcast %cst_19 : f32 to vector<32x16xf32>
    %42 = vector.extract_strided_slice %40 {offsets = [0, 16], sizes = [32, 112], strides = [1, 1]} : vector<32x128xf32> to vector<32x112xf32>
    %43 = tpu.concatenate %42, %41 in 1 : vector<32x112xf32>, vector<32x16xf32> -> vector<32x128xf32>
    %44 = arith.maximumf %40, %43 : vector<32x128xf32>
    %45 = vector.extract_strided_slice %44 {offsets = [0, 0], sizes = [2, 128], strides = [1, 1]} : vector<32x128xf32> to vector<2x128xf32>
    %46 = vector.extract_strided_slice %44 {offsets = [8, 0], sizes = [2, 128], strides = [1, 1]} : vector<32x128xf32> to vector<2x128xf32>
    %47 = vector.extract_strided_slice %44 {offsets = [16, 0], sizes = [2, 128], strides = [1, 1]} : vector<32x128xf32> to vector<2x128xf32>
    %48 = vector.extract_strided_slice %44 {offsets = [24, 0], sizes = [2, 128], strides = [1, 1]} : vector<32x128xf32> to vector<2x128xf32>
    %49 = tpu.concatenate %45, %46, %47, %48 in 1 : vector<2x128xf32>, vector<2x128xf32>, vector<2x128xf32>, vector<2x128xf32> -> vector<2x512xf32>
    %c0_20 = arith.constant 0 : index
    %c0_21 = arith.constant 0 : index
    %50 = vector.load %arg5[%c0_20, %c0_21] : memref<512x128xf32, #tpu.memory_space<vmem>>, vector<512x128xf32>
    %cst_22 = arith.constant dense<0.000000e+00> : vector<2x128xf32>
    %51 = tpu.matmul %49, %50, %cst_22 {dimension_numbers = #tpu.dot_dimension_numbers<[1], [0], [0], [1], [0, 0, 1, 1], [], []>} : vector<2x512xf32>, vector<512x128xf32>, vector<2x128xf32> -> vector<2x128xf32>
    %c0_23 = arith.constant 0 : index
    %c0_24 = arith.constant 0 : index
    %52 = vector.load %arg6[%c0_23, %c0_24] : memref<1x128xf32, #tpu.memory_space<vmem>>, vector<1x128xf32>
    %53 = vector.broadcast %52 : vector<1x128xf32> to vector<2x128xf32>
    %54 = arith.addf %51, %53 : vector<2x128xf32>
    %cst_25 = arith.constant 0.000000e+00 : f32
    %55 = vector.broadcast %cst_25 : f32 to vector<2x128xf32>
    %56 = arith.maximumf %54, %55 : vector<2x128xf32>
    %c0_26 = arith.constant 0 : index
    %c0_27 = arith.constant 0 : index
    %57 = vector.load %arg7[%c0_26, %c0_27] : memref<128x64xf32, #tpu.memory_space<vmem>>, vector<128x64xf32>
    %cst_28 = arith.constant dense<0.000000e+00> : vector<2x64xf32>
    %58 = tpu.matmul %56, %57, %cst_28 {dimension_numbers = #tpu.dot_dimension_numbers<[1], [0], [0], [1], [0, 0, 1, 1], [], []>} : vector<2x128xf32>, vector<128x64xf32>, vector<2x64xf32> -> vector<2x64xf32>
    %c0_29 = arith.constant 0 : index
    %c0_30 = arith.constant 0 : index
    %59 = vector.load %arg8[%c0_29, %c0_30] : memref<1x64xf32, #tpu.memory_space<vmem>>, vector<1x64xf32>
    %60 = vector.broadcast %59 : vector<1x64xf32> to vector<2x64xf32>
    %61 = arith.addf %58, %60 : vector<2x64xf32>
    %cst_31 = arith.constant 0.000000e+00 : f32
    %62 = vector.broadcast %cst_31 : f32 to vector<2x64xf32>
    %63 = arith.maximumf %61, %62 : vector<2x64xf32>
    %c0_32 = arith.constant 0 : index
    %c0_33 = arith.constant 0 : index
    %64 = vector.load %arg9[%c0_32, %c0_33] : memref<64x128xf32, #tpu.memory_space<vmem>>, vector<64x128xf32>
    %cst_34 = arith.constant dense<0.000000e+00> : vector<2x128xf32>
    %65 = tpu.matmul %63, %64, %cst_34 {dimension_numbers = #tpu.dot_dimension_numbers<[1], [0], [0], [1], [0, 0, 1, 1], [], []>} : vector<2x64xf32>, vector<64x128xf32>, vector<2x128xf32> -> vector<2x128xf32>
    %c0_35 = arith.constant 0 : index
    %c0_36 = arith.constant 0 : index
    %66 = vector.load %arg10[%c0_35, %c0_36] : memref<1x128xf32, #tpu.memory_space<vmem>>, vector<1x128xf32>
    %67 = vector.broadcast %66 : vector<1x128xf32> to vector<2x128xf32>
    %68 = arith.addf %65, %67 : vector<2x128xf32>
    %c0_37 = arith.constant 0 : index
    %c0_38 = arith.constant 0 : index
    %69 = vector.load %arg11[%c0_37, %c0_38] : memref<2x128xf32, #tpu.memory_space<vmem>>, vector<2x128xf32>
    tpu.vector_store %arg11[%c0_37, %c0_38], %68 {strides = array<i32>} : memref<2x128xf32, #tpu.memory_space<vmem>>, vector<2x128xf32>,
    return
  }
}

</mosaic_0001>

<llo_original>
// kernel: tpu_custom_call.1
$region0: #{tpu_custom_call.1}
  #allocation0 [shape = 'u32[]', space=smem, size = 0x4, offset = 0x4, fixed_abs, tag = 'smem constant byte address 0x4 - core index']
  #allocation1 [shape = 'u32[144,128]{1,0:T(1,128)}', space=vmem, size = 0x12000, scoped, tag = 'internal scratch']
  %s0 = inlined_call_operand.hbm [shape: f32[32,64], index: 0, kind: input, shape index: {}]
  %s1 = inlined_call_operand.vmem [shape: f32[192,128], index: 1, kind: input, shape index: {}]
  %s2 = inlined_call_operand.vmem [shape: f32[1,128], index: 2, kind: input, shape index: {}]
  %s3 = inlined_call_operand.hbm [shape: f32[384,128], index: 3, kind: input, shape index: {}]
  %s4 = inlined_call_operand.vmem [shape: f32[1,128], index: 4, kind: input, shape index: {}]
  %s5 = inlined_call_operand.hbm [shape: f32[512,128], index: 5, kind: input, shape index: {}]
  %s6 = inlined_call_operand.vmem [shape: f32[1,128], index: 6, kind: input, shape index: {}]
  %s7 = inlined_call_operand.vmem [shape: f32[128,64], index: 7, kind: input, shape index: {}]
  %s8 = inlined_call_operand.vmem [shape: f32[1,64], index: 8, kind: input, shape index: {}]
  %s9 = inlined_call_operand.hbm [shape: f32[64,128], index: 9, kind: input, shape index: {}]
  %s10 = inlined_call_operand.vmem [shape: f32[1,128], index: 10, kind: input, shape index: {}]
  %s11 = inlined_call_operand.hbm [shape: f32[2,128], index: 11, kind: output, shape index: {}]
  %s12 = sld [smem:[#allocation0]]
  $region70: #{tpu_custom_call.1} parent=0
    _
  %s14 = ssub.s32 1, %s12
  %s15 = scalar_select 0, %s14, %s12
  $region1: #{tpu_custom_call.1} parent=0
    #allocation2 [shape = 'u8[16384]{0}', space=vmem, size = 0x4000, scoped, tag = 'input window, operand 0, single buffered']
    #allocation3 [shape = 's32[1]{0}', space=sflag, size = 0x4, scoped, tag = 'scoped memory for tpu_custom_call.1']
    #allocation4 [shape = 's32[1]{0}', space=sflag, size = 0x4, scoped, tag = 'scoped memory for tpu_custom_call.1']
    #allocation5 [shape = 'u8[196608]{0}', space=vmem, size = 0x30000, scoped, tag = 'input window, operand 3, single buffered']
    #allocation6 [shape = 's32[1]{0}', space=sflag, size = 0x4, scoped, tag = 'scoped memory for tpu_custom_call.1']
    #allocation7 [shape = 'u8[262144]{0}', space=vmem, size = 0x40000, scoped, tag = 'input window, operand 5, single buffered']
    #allocation8 [shape = 'u8[32768]{0}', space=vmem, size = 0x8000, scoped, tag = 'input window, operand 9, single buffered']
    #allocation9 [shape = 's32[1]{0}', space=sflag, size = 0x4, scoped, tag = 'scoped memory for tpu_custom_call.1']
    #allocation10 [shape = 'u8[1024]{0}', space=vmem, size = 0x400, scoped, tag = 'output window, operand 0, single buffered']
    %16 = vsyncpa [#allocation3], 0
    %17 = vsyncpa [#allocation6], 0
    %18 = vsyncpa [#allocation9], 0
    %19 = vsyncpa [#allocation4], 0
    // Predicated region
    $region2: #{tpu_custom_call.1} parent=1 // pred_check
      _
    $region3: #{tpu_custom_call.1} parent=1 // pred_check_branch
      %21 = sbr.rel (0) target = $region5
    $region4: #{tpu_custom_call.1} parent=1 // pred_region
      %s23 = ssub.s32 512, 512
      %24 = vsyncadd [#allocation3], %s23
      %s25 = sshll.u32 [#allocation2], 4
      %s26 = int_to_ptr.vmem [resolvable:$true] %s25
      %31 = dma.hbm_to_vmem [thread:$0]  %s0, 512, %s26, [#allocation3], 128, 128, 8
    $region5: #{tpu_custom_call.1} parent=1 // pred_fallthru
      _
    // Predicated region
    $region6: #{tpu_custom_call.1} parent=1 // pred_check
      _
    $region7: #{tpu_custom_call.1} parent=1 // pred_check_branch
      %33 = sbr.rel (0) target = $region9
    $region8: #{tpu_custom_call.1} parent=1 // pred_region
      _
    $region9: #{tpu_custom_call.1} parent=1 // pred_fallthru
      _
    // Predicated region
    $region10: #{tpu_custom_call.1} parent=1 // pred_check
      _
    $region11: #{tpu_custom_call.1} parent=1 // pred_check_branch
      %35 = sbr.rel (0) target = $region13
    $region12: #{tpu_custom_call.1} parent=1 // pred_region
      _
    $region13: #{tpu_custom_call.1} parent=1 // pred_fallthru
      _
    // Predicated region
    $region14: #{tpu_custom_call.1} parent=1 // pred_check
      _
    $region15: #{tpu_custom_call.1} parent=1 // pred_check_branch
      %37 = sbr.rel (0) target = $region17
    $region16: #{tpu_custom_call.1} parent=1 // pred_region
      %s39 = ssub.s32 6144, 6144
      %40 = vsyncadd [#allocation6], %s39
      %s41 = sshll.u32 [#allocation5], 4
      %s42 = int_to_ptr.vmem [resolvable:$true] %s41
      %47 = dma.hbm_to_vmem [thread:$0]  %s3, 6144, %s42, [#allocation6], 128, 128, 8
    $region17: #{tpu_custom_call.1} parent=1 // pred_fallthru
      _
    // Predicated region
    $region18: #{tpu_custom_call.1} parent=1 // pred_check
      _
    $region19: #{tpu_custom_call.1} parent=1 // pred_check_branch
      %49 = sbr.rel (0) target = $region21
    $region20: #{tpu_custom_call.1} parent=1 // pred_region
      _
    $region21: #{tpu_custom_call.1} parent=1 // pred_fallthru
      _
    // Predicated region
    $region22: #{tpu_custom_call.1} parent=1 // pred_check
      _
    $region23: #{tpu_custom_call.1} parent=1 // pred_check_branch
      %51 = sbr.rel (0) target = $region25
    $region24: #{tpu_custom_call.1} parent=1 // pred_region
      %s53 = ssub.s32 8192, 8192
      %54 = vsyncadd [#allocation6], %s53
      %s55 = sshll.u32 [#allocation7], 4
      %s56 = int_to_ptr.vmem [resolvable:$true] %s55
      %61 = dma.hbm_to_vmem [thread:$0]  %s5, 8192, %s56, [#allocation6], 128, 128, 8
    $region25: #{tpu_custom_call.1} parent=1 // pred_fallthru
      _
    // Predicated region
    $region26: #{tpu_custom_call.1} parent=1 // pred_check
      _
    $region27: #{tpu_custom_call.1} parent=1 // pred_check_branch
      %63 = sbr.rel (0) target = $region29
    $region28: #{tpu_custom_call.1} parent=1 // pred_region
      _
    $region29: #{tpu_custom_call.1} parent=1 // pred_fallthru
      _
    // Predicated region
    $region30: #{tpu_custom_call.1} parent=1 // pred_check
      _
    $region31: #{tpu_custom_call.1} parent=1 // pred_check_branch
      %65 = sbr.rel (0) target = $region33
    $region32: #{tpu_custom_call.1} parent=1 // pred_region
      _
    $region33: #{tpu_custom_call.1} parent=1 // pred_fallthru
      _
    // Predicated region
    $region34: #{tpu_custom_call.1} parent=1 // pred_check
      _
    $region35: #{tpu_custom_call.1} parent=1 // pred_check_branch
      %67 = sbr.rel (0) target = $region37
    $region36: #{tpu_custom_call.1} parent=1 // pred_region
      _
    $region37: #{tpu_custom_call.1} parent=1 // pred_fallthru
      _
    // Predicated region
    $region38: #{tpu_custom_call.1} parent=1 // pred_check
      _
    $region39: #{tpu_custom_call.1} parent=1 // pred_check_branch
      %69 = sbr.rel (0) target = $region41
    $region40: #{tpu_custom_call.1} parent=1 // pred_region
      %s71 = ssub.s32 1024, 1024
      %72 = vsyncadd [#allocation9], %s71
      %s73 = sshll.u32 [#allocation8], 4
      %s74 = int_to_ptr.vmem [resolvable:$true] %s73
      %79 = dma.hbm_to_vmem [thread:$0]  %s9, 1024, %s74, [#allocation9], 128, 128, 8
    $region41: #{tpu_custom_call.1} parent=1 // pred_fallthru
      _
    // Predicated region
    $region42: #{tpu_custom_call.1} parent=1 // pred_check
      _
    $region43: #{tpu_custom_call.1} parent=1 // pred_check_branch
      %81 = sbr.rel (0) target = $region45
    $region44: #{tpu_custom_call.1} parent=1 // pred_region
      _
    $region45: #{tpu_custom_call.1} parent=1 // pred_fallthru
      _
    // Predicated region
    $region46: #{tpu_custom_call.1} parent=1 // pred_check
      _
    $region47: #{tpu_custom_call.1} parent=1 // pred_check_branch
      %83 = sbr.rel (0) target = $region49
    $region48: #{tpu_custom_call.1} parent=1 // pred_region
      %84 = dma.done [#allocation3], 512
    $region49: #{tpu_custom_call.1} parent=1 // pred_fallthru
      _
    // Predicated region
    $region50: #{tpu_custom_call.1} parent=1 // pred_check
      _
    $region51: #{tpu_custom_call.1} parent=1 // pred_check_branch
      %86 = sbr.rel (0) target = $region53
    $region52: #{tpu_custom_call.1} parent=1 // pred_region
      %87 = dma.done [#allocation6], 6144
    $region53: #{tpu_custom_call.1} parent=1 // pred_fallthru
      _
    // Predicated region
    $region54: #{tpu_custom_call.1} parent=1 // pred_check
      _
    $region55: #{tpu_custom_call.1} parent=1 // pred_check_branch
      %89 = sbr.rel (0) target = $region57
    $region56: #{tpu_custom_call.1} parent=1 // pred_region
      %90 = dma.done [#allocation6], 8192
    $region57: #{tpu_custom_call.1} parent=1 // pred_fallthru
      _
    // Predicated region
    $region58: #{tpu_custom_call.1} parent=1 // pred_check
      _
    $region59: #{tpu_custom_call.1} parent=1 // pred_check_branch
      %92 = sbr.rel (0) target = $region61
    $region60: #{tpu_custom_call.1} parent=1 // pred_region
      %93 = dma.done [#allocation9], 1024
    $region61: #{tpu_custom_call.1} parent=1 // pred_fallthru
      _
    %v94 = vld [vmem:[#allocation2] sm:$0xff]
    %v95 = vld [vmem:[#allocation2 + $0x8] sm:$0xff]
    %v96 = vld [vmem:[#allocation2 + $0x10] sm:$0xff]
    %v97 = vld [vmem:[#allocation2 + $0x18] sm:$0xff]
    %vm102 = vcmask 1041408
    %v103 = vrot.slane %v94, 6
    %v104 = vrot.slane %v95, 6
    %v105 = vsel %vm102, %v103, %v104
    %v106 = vrot.slane %v96, 6
    %v107 = vsel %vm102, %v104, %v106
    %v108 = vrot.slane %v97, 6
    %v109 = vsel %vm102, %v106, %v108
    %v114 = vsel %vm102, 0.0, %v103
    %vm115 = vcmask 1045504
    %v116 = vrot.slane %v94, 2
    %v117 = vrot.slane %v95, 2
    %v118 = vsel %vm115, %v116, %v117
    %v119 = vrot.slane %v96, 2
    %v120 = vsel %vm115, %v117, %v119
    %v121 = vrot.slane %v97, 2
    %v122 = vsel %vm115, %v119, %v121
    %v124 = vsel %vm115, %v121, 0.0
    %125 = vrot.lane.b32.xlu0 %v94, 64
    %v126 = vpop.permute.xlu0 %125
    %127 = vrot.lane.b32.xlu0 %v95, 64
    %v128 = vpop.permute.xlu0 %127
    %129 = vrot.lane.b32.xlu0 %v96, 64
    %v130 = vpop.permute.xlu0 %129
    %131 = vrot.lane.b32.xlu0 %v97, 64
    %v132 = vpop.permute.xlu0 %131
    %vm137 = vcmask 523264
    %v138 = vsel %vm137, %v114, %v126
    %v139 = vsel %vm137, %v105, %v128
    %v140 = vsel %vm137, %v107, %v130
    %v141 = vsel %vm137, %v109, %v132
    %v142 = vld [vmem:[%s1] sm:$0xff]
    %v143 = vld [vmem:[%s1 + $0x8] sm:$0xff]
    %v144 = vld [vmem:[%s1 + $0x10] sm:$0xff]
    %v145 = vld [vmem:[%s1 + $0x18] sm:$0xff]
    %v146 = vld [vmem:[%s1 + $0x20] sm:$0xff]
    %v147 = vld [vmem:[%s1 + $0x28] sm:$0xff]
    %v148 = vld [vmem:[%s1 + $0x30] sm:$0xff]
    %v149 = vld [vmem:[%s1 + $0x38] sm:$0xff]
    %v150 = vld [vmem:[%s1 + $0x40] sm:$0xff]
    %v151 = vld [vmem:[%s1 + $0x48] sm:$0xff]
    %v152 = vld [vmem:[%s1 + $0x50] sm:$0xff]
    %v153 = vld [vmem:[%s1 + $0x58] sm:$0xff]
    %v154 = vld [vmem:[%s1 + $0x60] sm:$0xff]
    %v155 = vld [vmem:[%s1 + $0x68] sm:$0xff]
    %v156 = vld [vmem:[%s1 + $0x70] sm:$0xff]
    %v157 = vld [vmem:[%s1 + $0x78] sm:$0xff]
    %v158 = vld [vmem:[%s1 + $0x80] sm:$0xff]
    %v159 = vld [vmem:[%s1 + $0x88] sm:$0xff]
    %v160 = vld [vmem:[%s1 + $0x90] sm:$0xff]
    %v161 = vld [vmem:[%s1 + $0x98] sm:$0xff]
    %v162 = vld [vmem:[%s1 + $0xa0] sm:$0xff]
    %v163 = vld [vmem:[%s1 + $0xa8] sm:$0xff]
    %v164 = vld [vmem:[%s1 + $0xb0] sm:$0xff]
    %v165 = vld [vmem:[%s1 + $0xb8] sm:$0xff]
    %v166 = vld [vmem:[%s2] sm:$0x1]
    %v168 = vlaneseq
    %v169 = vshrl.u32 %v168, 7
    %v170 = vsub.s32 0, %v169
    %v171 = vrot.slane %v166, %v170
    %v173 = vsel %vm137, %v118, 0
    %v175 = vsel %vm137, %v120, 0
    %v177 = vsel %vm137, %v122, 0
    %v180 = vsel %vm137, %v124, 0
    %182 = vmatprep.subr.mxu0 0.0
    %183 = vmatpush1.msra.mxu0 %v157
    %184 = vmatprep.subr.mxu0 0.0
    %185 = vmatpush1.msra.mxu0 %v156
    %186 = vmatprep.subr.mxu0 0.0
    %187 = vmatpush1.msra.mxu0 %v155
    %188 = vmatprep.subr.mxu0 0.0
    %189 = vmatpush1.msra.mxu0 %v154
    %190 = vmatprep.subr.mxu0 0.0
    %191 = vmatpush1.msra.mxu0 %v153
    %192 = vmatprep.subr.mxu0 0.0
    %193 = vmatpush1.msra.mxu0 %v152
    %194 = vmatprep.subr.mxu0 0.0
    %195 = vmatpush1.msra.mxu0 %v151
    %196 = vmatprep.subr.mxu0 0.0
    %197 = vmatpush1.msra.mxu0 %v150
    %198 = vmatprep.subr.mxu0 0.0
    %199 = vmatpush1.msra.mxu0 %v149
    %200 = vmatprep.subr.mxu0 0.0
    %201 = vmatpush1.msra.mxu0 %v148
    %202 = vmatprep.subr.mxu0 0.0
    %203 = vmatpush1.msra.mxu0 %v147
    %204 = vmatprep.subr.mxu0 0.0
    %205 = vmatpush1.msra.mxu0 %v146
    %206 = vmatprep.subr.mxu0 0.0
    %207 = vmatpush1.msra.mxu0 %v145
    %208 = vmatprep.subr.mxu0 0.0
    %209 = vmatpush1.msra.mxu0 %v144
    %210 = vmatprep.subr.mxu0 0.0
    %211 = vmatpush1.msra.mxu0 %v143
    %212 = vmatprep.subr.mxu0 0.0
    %213 = vmatpush1.msra.mxu0 %v142
    %214 = vmatprep.subr.mxu0 0.0
    %215 = vmatpush2.msra.mxu0 0.0
    %216 = vmatprep.subr.mxu0 0.0
    %217 = vmatpush2.msra.mxu0 0.0
    %218 = vmatprep.subr.mxu0 0.0
    %219 = vmatpush2.msra.mxu0 0.0
    %220 = vmatprep.subr.mxu0 0.0
    %221 = vmatpush2.msra.mxu0 0.0
    %222 = vmatprep.subr.mxu0 0.0
    %223 = vmatpush2.msra.mxu0 0.0
    %224 = vmatprep.subr.mxu0 0.0
    %225 = vmatpush2.msra.mxu0 0.0
    %226 = vmatprep.subr.mxu0 0.0
    %227 = vmatpush2.msra.mxu0 0.0
    %228 = vmatprep.subr.mxu0 0.0
    %229 = vmatpush2.msra.mxu0 0.0
    %230 = vmatprep.subr.mxu0 0.0
    %231 = vmatpush2.msra.mxu0 %v165
    %232 = vmatprep.subr.mxu0 0.0
    %233 = vmatpush2.msra.mxu0 %v164
    %234 = vmatprep.subr.mxu0 0.0
    %235 = vmatpush2.msra.mxu0 %v163
    %236 = vmatprep.subr.mxu0 0.0
    %237 = vmatpush2.msra.mxu0 %v162
    %238 = vmatprep.subr.mxu0 0.0
    %239 = vmatpush2.msra.mxu0 %v161
    %240 = vmatprep.subr.mxu0 0.0
    %241 = vmatpush2.msra.mxu0 %v160
    %242 = vmatprep.subr.mxu0 0.0
    %243 = vmatpush2.msra.mxu0 %v159
    %244 = vmatprep.subr.mxu0 0.0
    %245 = vmatpush2.msra.mxu0 %v158
    %246 = vmatprep.mubr.f32.mxu0 %v173
    %247 = vmatmul.mubr.f32.gmra.mxu0 %v138
    %v248 = vpop.f32.mrf.mxu0
    %v249 = vadd.f32 %v171, %v248
    %v250 = vpop.f32.mrf.mxu0
    %251 = vmatprep.mubr.f32.mxu0 %v175
    %252 = vmatmul.mubr.f32.gmra.mxu0 %v139
    %v253 = vpop.f32.mrf.mxu0
    %v254 = vadd.f32 %v171, %v253
    %v255 = vpop.f32.mrf.mxu0
    %256 = vmatprep.mubr.f32.mxu0 %v177
    %257 = vmatmul.mubr.f32.gmra.mxu0 %v140
    %v258 = vpop.f32.mrf.mxu0
    %v259 = vadd.f32 %v171, %v258
    %v260 = vpop.f32.mrf.mxu0
    %261 = vmatprep.mubr.f32.mxu0 %v180
    %262 = vmatmul.mubr.f32.gmra.mxu0 %v141
    %v263 = vpop.f32.mrf.mxu0
    %v264 = vadd.f32 %v171, %v263
    %v265 = vpop.f32.mrf.mxu0
    %266 = vdwg.mxu0
    %v267 = vmax.f32 %v249, 0.0
    %v268 = vmax.f32 %v254, 0.0
    %v269 = vmax.f32 %v259, 0.0
    %v270 = vmax.f32 %v264, 0.0
    %v275 = vrot.slane %v267, 2
    %v276 = vrot.slane %v268, 2
    %v277 = vsel %vm115, %v275, %v276
    %v278 = vrot.slane %v269, 2
    %v279 = vsel %vm115, %v276, %v278
    %v280 = vrot.slane %v270, 2
    %v281 = vsel %vm115, %v278, %v280
    %v286 = vsel %vm115, %v280, 0.0
    %v287 = vmax.f32 %v267, %v277
    %v288 = vmax.f32 %v268, %v279
    %v289 = vmax.f32 %v269, %v281
    %v290 = vmax.f32 %v270, %v286
    %295 = vrot.lane.b32.xlu0 %v287, 120
    %v296 = vpop.permute.xlu0 %295
    %297 = vrot.lane.b32.xlu0 %v288, 120
    %v298 = vpop.permute.xlu0 %297
    %299 = vrot.lane.b32.xlu0 %v289, 120
    %v300 = vpop.permute.xlu0 %299
    %301 = vrot.lane.b32.xlu0 %v290, 120
    %v302 = vpop.permute.xlu0 %301
    %vm307 = vcmask 982016
    %v308 = vsel %vm307, %v296, 0.0
    %v309 = vsel %vm307, %v298, 0.0
    %v310 = vsel %vm307, %v300, 0.0
    %v311 = vsel %vm307, %v302, 0.0
    %v312 = vmax.f32 %v287, %v308
    %v313 = vmax.f32 %v288, %v309
    %v314 = vmax.f32 %v289, %v310
    %v315 = vmax.f32 %v290, %v311
    %vm320 = vcmask 1043456
    %v321 = vrot.slane %v312, 4
    %v322 = vrot.slane %v313, 4
    %v323 = vsel %vm320, %v321, %v322
    %v324 = vrot.slane %v314, 4
    %v325 = vsel %vm320, %v322, %v324
    %v326 = vrot.slane %v315, 4
    %v327 = vsel %vm320, %v324, %v326
    %v332 = vsel %vm320, 0.0, %v321
    %v334 = vsel %vm320, %v326, 0.0
    %v335 = vld [vmem:[#allocation5] sm:$0xff]
    %v336 = vld [vmem:[#allocation5 + $0x8] sm:$0xff]
    %v337 = vld [vmem:[#allocation5 + $0x10] sm:$0xff]
    %v338 = vld [vmem:[#allocation5 + $0x18] sm:$0xff]
    %v339 = vld [vmem:[#allocation5 + $0x20] sm:$0xff]
    %v340 = vld [vmem:[#allocation5 + $0x28] sm:$0xff]
    %v341 = vld [vmem:[#allocation5 + $0x30] sm:$0xff]
    %v342 = vld [vmem:[#allocation5 + $0x38] sm:$0xff]
    %v343 = vld [vmem:[#allocation5 + $0x40] sm:$0xff]
    %v344 = vld [vmem:[#allocation5 + $0x48] sm:$0xff]
    %v345 = vld [vmem:[#allocation5 + $0x50] sm:$0xff]
    %v346 = vld [vmem:[#allocation5 + $0x58] sm:$0xff]
    %v347 = vld [vmem:[#allocation5 + $0x60] sm:$0xff]
    %v348 = vld [vmem:[#allocation5 + $0x68] sm:$0xff]
    %v349 = vld [vmem:[#allocation5 + $0x70] sm:$0xff]
    %v350 = vld [vmem:[#allocation5 + $0x78] sm:$0xff]
    %v351 = vld [vmem:[#allocation5 + $0x80] sm:$0xff]
    %v352 = vld [vmem:[#allocation5 + $0x88] sm:$0xff]
    %v353 = vld [vmem:[#allocation5 + $0x90] sm:$0xff]
    %v354 = vld [vmem:[#allocation5 + $0x98] sm:$0xff]
    %v355 = vld [vmem:[#allocation5 + $0xa0] sm:$0xff]
    %v356 = vld [vmem:[#allocation5 + $0xa8] sm:$0xff]
    %v357 = vld [vmem:[#allocation5 + $0xb0] sm:$0xff]
    %v358 = vld [vmem:[#allocation5 + $0xb8] sm:$0xff]
    %v359 = vld [vmem:[#allocation5 + $0xc0] sm:$0xff]
    %v360 = vld [vmem:[#allocation5 + $0xc8] sm:$0xff]
    %v361 = vld [vmem:[#allocation5 + $0xd0] sm:$0xff]
    %v362 = vld [vmem:[#allocation5 + $0xd8] sm:$0xff]
    %v363 = vld [vmem:[#allocation5 + $0xe0] sm:$0xff]
    %v364 = vld [vmem:[#allocation5 + $0xe8] sm:$0xff]
    %v365 = vld [vmem:[#allocation5 + $0xf0] sm:$0xff]
    %v366 = vld [vmem:[#allocation5 + $0xf8] sm:$0xff]
    %v367 = vld [vmem:[#allocation5 + $0x100] sm:$0xff]
    %v368 = vld [vmem:[#allocation5 + $0x108] sm:$0xff]
    %v369 = vld [vmem:[#allocation5 + $0x110] sm:$0xff]
    %v370 = vld [vmem:[#allocation5 + $0x118] sm:$0xff]
    %v371 = vld [vmem:[#allocation5 + $0x120] sm:$0xff]
    %v372 = vld [vmem:[#allocation5 + $0x128] sm:$0xff]
    %v373 = vld [vmem:[#allocation5 + $0x130] sm:$0xff]
    %v374 = vld [vmem:[#allocation5 + $0x138] sm:$0xff]
    %v375 = vld [vmem:[#allocation5 + $0x140] sm:$0xff]
    %v376 = vld [vmem:[#allocation5 + $0x148] sm:$0xff]
    %v377 = vld [vmem:[#allocation5 + $0x150] sm:$0xff]
    %v378 = vld [vmem:[#allocation5 + $0x158] sm:$0xff]
    %v379 = vld [vmem:[#allocation5 + $0x160] sm:$0xff]
    %v380 = vld [vmem:[#allocation5 + $0x168] sm:$0xff]
    %v381 = vld [vmem:[#allocation5 + $0x170] sm:$0xff]
    %v382 = vld [vmem:[#allocation5 + $0x178] sm:$0xff]
    %v383 = vld [vmem:[%s4] sm:$0x1]
    %v385 = vlaneseq
    %v386 = vshrl.u32 %v385, 7
    %v387 = vsub.s32 0, %v386
    %v388 = vrot.slane %v383, %v387
    %390 = vmatprep.subr.mxu0 0.0
    %391 = vmatpush1.msra.mxu0 %v350
    %392 = vmatprep.subr.mxu0 0.0
    %393 = vmatpush1.msra.mxu0 %v349
    %394 = vmatprep.subr.mxu0 0.0
    %395 = vmatpush1.msra.mxu0 %v348
    %396 = vmatprep.subr.mxu0 0.0
    %397 = vmatpush1.msra.mxu0 %v347
    %398 = vmatprep.subr.mxu0 0.0
    %399 = vmatpush1.msra.mxu0 %v346
    %400 = vmatprep.subr.mxu0 0.0
    %401 = vmatpush1.msra.mxu0 %v345
    %402 = vmatprep.subr.mxu0 0.0
    %403 = vmatpush1.msra.mxu0 %v344
    %404 = vmatprep.subr.mxu0 0.0
    %405 = vmatpush1.msra.mxu0 %v343
    %406 = vmatprep.subr.mxu0 0.0
    %407 = vmatpush1.msra.mxu0 %v342
    %408 = vmatprep.subr.mxu0 0.0
    %409 = vmatpush1.msra.mxu0 %v341
    %410 = vmatprep.subr.mxu0 0.0
    %411 = vmatpush1.msra.mxu0 %v340
    %412 = vmatprep.subr.mxu0 0.0
    %413 = vmatpush1.msra.mxu0 %v339
    %414 = vmatprep.subr.mxu0 0.0
    %415 = vmatpush1.msra.mxu0 %v338
    %416 = vmatprep.subr.mxu0 0.0
    %417 = vmatpush1.msra.mxu0 %v337
    %418 = vmatprep.subr.mxu0 0.0
    %419 = vmatpush1.msra.mxu0 %v336
    %420 = vmatprep.subr.mxu0 0.0
    %421 = vmatpush1.msra.mxu0 %v335
    %422 = vmatprep.subr.mxu0 0.0
    %423 = vmatpush2.msra.mxu0 %v366
    %424 = vmatprep.subr.mxu0 0.0
    %425 = vmatpush2.msra.mxu0 %v365
    %426 = vmatprep.subr.mxu0 0.0
    %427 = vmatpush2.msra.mxu0 %v364
    %428 = vmatprep.subr.mxu0 0.0
    %429 = vmatpush2.msra.mxu0 %v363
    %430 = vmatprep.subr.mxu0 0.0
    %431 = vmatpush2.msra.mxu0 %v362
    %432 = vmatprep.subr.mxu0 0.0
    %433 = vmatpush2.msra.mxu0 %v361
    %434 = vmatprep.subr.mxu0 0.0
    %435 = vmatpush2.msra.mxu0 %v360
    %436 = vmatprep.subr.mxu0 0.0
    %437 = vmatpush2.msra.mxu0 %v359
    %438 = vmatprep.subr.mxu0 0.0
    %439 = vmatpush2.msra.mxu0 %v358
    %440 = vmatprep.subr.mxu0 0.0
    %441 = vmatpush2.msra.mxu0 %v357
    %442 = vmatprep.subr.mxu0 0.0
    %443 = vmatpush2.msra.mxu0 %v356
    %444 = vmatprep.subr.mxu0 0.0
    %445 = vmatpush2.msra.mxu0 %v355
    %446 = vmatprep.subr.mxu0 0.0
    %447 = vmatpush2.msra.mxu0 %v354
    %448 = vmatprep.subr.mxu0 0.0
    %449 = vmatpush2.msra.mxu0 %v353
    %450 = vmatprep.subr.mxu0 0.0
    %451 = vmatpush2.msra.mxu0 %v352
    %452 = vmatprep.subr.mxu0 0.0
    %453 = vmatpush2.msra.mxu0 %v351
    %454 = vmatprep.mubr.f32.mxu0 %v312
    %455 = vmatmul.mubr.f32.gmra.mxu0 %v332
    %v456 = vpop.f32.mrf.mxu0
    %v457 = vadd.f32 %v388, %v456
    %v458 = vpop.f32.mrf.mxu0
    %459 = vmatprep.mubr.f32.mxu0 %v313
    %460 = vmatmul.mubr.f32.gmra.mxu0 %v323
    %v461 = vpop.f32.mrf.mxu0
    %v462 = vadd.f32 %v388, %v461
    %v463 = vpop.f32.mrf.mxu0
    %464 = vmatprep.mubr.f32.mxu0 %v314
    %465 = vmatmul.mubr.f32.gmra.mxu0 %v325
    %v466 = vpop.f32.mrf.mxu0
    %v467 = vadd.f32 %v388, %v466
    %v468 = vpop.f32.mrf.mxu0
    %469 = vmatprep.mubr.f32.mxu0 %v315
    %470 = vmatmul.mubr.f32.gmra.mxu0 %v327
    %v471 = vpop.f32.mrf.mxu0
    %v472 = vadd.f32 %v388, %v471
    %v473 = vpop.f32.mrf.mxu0
    %474 = vdwg.mxu0
    %475 = vmatprep.subr.mxu0 0.0
    %476 = vmatpush1.msra.mxu0 %v382
    %477 = vmatprep.subr.mxu0 0.0
    %478 = vmatpush1.msra.mxu0 %v381
    %479 = vmatprep.subr.mxu0 0.0
    %480 = vmatpush1.msra.mxu0 %v380
    %481 = vmatprep.subr.mxu0 0.0
    %482 = vmatpush1.msra.mxu0 %v379
    %483 = vmatprep.subr.mxu0 0.0
    %484 = vmatpush1.msra.mxu0 %v378
    %485 = vmatprep.subr.mxu0 0.0
    %486 = vmatpush1.msra.mxu0 %v377
    %487 = vmatprep.subr.mxu0 0.0
    %488 = vmatpush1.msra.mxu0 %v376
    %489 = vmatprep.subr.mxu0 0.0
    %490 = vmatpush1.msra.mxu0 %v375
    %491 = vmatprep.subr.mxu0 0.0
    %492 = vmatpush1.msra.mxu0 %v374
    %493 = vmatprep.subr.mxu0 0.0
    %494 = vmatpush1.msra.mxu0 %v373
    %495 = vmatprep.subr.mxu0 0.0
    %496 = vmatpush1.msra.mxu0 %v372
    %497 = vmatprep.subr.mxu0 0.0
    %498 = vmatpush1.msra.mxu0 %v371
    %499 = vmatprep.subr.mxu0 0.0
    %500 = vmatpush1.msra.mxu0 %v370
    %501 = vmatprep.subr.mxu0 0.0
    %502 = vmatpush1.msra.mxu0 %v369
    %503 = vmatprep.subr.mxu0 0.0
    %504 = vmatpush1.msra.mxu0 %v368
    %505 = vmatprep.subr.mxu0 0.0
    %506 = vmatpush1.msra.mxu0 %v367
    %507 = vmatprep.subr.mxu0 0.0
    %508 = vmatpush2.msra.mxu0 0.0
    %509 = vmatprep.subr.mxu0 0.0
    %510 = vmatpush2.msra.mxu0 0.0
    %511 = vmatprep.subr.mxu0 0.0
    %512 = vmatpush2.msra.mxu0 0.0
    %513 = vmatprep.subr.mxu0 0.0
    %514 = vmatpush2.msra.mxu0 0.0
    %515 = vmatprep.subr.mxu0 0.0
    %516 = vmatpush2.msra.mxu0 0.0
    %517 = vmatprep.subr.mxu0 0.0
    %518 = vmatpush2.msra.mxu0 0.0
    %519 = vmatprep.subr.mxu0 0.0
    %520 = vmatpush2.msra.mxu0 0.0
    %521 = vmatprep.subr.mxu0 0.0
    %522 = vmatpush2.msra.mxu0 0.0
    %523 = vmatprep.subr.mxu0 0.0
    %524 = vmatpush2.msra.mxu0 0.0
    %525 = vmatprep.subr.mxu0 0.0
    %526 = vmatpush2.msra.mxu0 0.0
    %527 = vmatprep.subr.mxu0 0.0
    %528 = vmatpush2.msra.mxu0 0.0
    %529 = vmatprep.subr.mxu0 0.0
    %530 = vmatpush2.msra.mxu0 0.0
    %531 = vmatprep.subr.mxu0 0.0
    %532 = vmatpush2.msra.mxu0 0.0
    %533 = vmatprep.subr.mxu0 0.0
    %534 = vmatpush2.msra.mxu0 0.0
    %535 = vmatprep.subr.mxu0 0.0
    %536 = vmatpush2.msra.mxu0 0.0
    %537 = vmatprep.subr.mxu0 0.0
    %538 = vmatpush2.msra.mxu0 0.0
    %539 = vmatprep.mubr.f32.mxu0 0.0
    %540 = vmatmul.mubr.f32.gmra.mxu0 %v323
    %v541 = vpop.f32.mrf.mxu0
    %v542 = vadd.f32 %v457, %v541
    %v543 = vpop.f32.mrf.mxu0
    %544 = vmatprep.mubr.f32.mxu0 0.0
    %545 = vmatmul.mubr.f32.gmra.mxu0 %v325
    %v546 = vpop.f32.mrf.mxu0
    %v547 = vadd.f32 %v462, %v546
    %v548 = vpop.f32.mrf.mxu0
    %549 = vmatprep.mubr.f32.mxu0 0.0
    %550 = vmatmul.mubr.f32.gmra.mxu0 %v327
    %v551 = vpop.f32.mrf.mxu0
    %v552 = vadd.f32 %v467, %v551
    %v553 = vpop.f32.mrf.mxu0
    %554 = vmatprep.mubr.f32.mxu0 0.0
    %555 = vmatmul.mubr.f32.gmra.mxu0 %v334
    %v556 = vpop.f32.mrf.mxu0
    %v557 = vadd.f32 %v472, %v556
    %v558 = vpop.f32.mrf.mxu0
    %559 = vdwg.mxu0
    %v560 = vmax.f32 %v542, 0.0
    %v561 = vmax.f32 %v547, 0.0
    %v562 = vmax.f32 %v552, 0.0
    %v563 = vmax.f32 %v557, 0.0
    %v568 = vrot.slane %v560, 4
    %v569 = vrot.slane %v561, 4
    %v570 = vsel %vm320, %v568, %v569
    %v571 = vrot.slane %v562, 4
    %v572 = vsel %vm320, %v569, %v571
    %v573 = vrot.slane %v563, 4
    %v574 = vsel %vm320, %v571, %v573
    %v579 = vsel %vm320, %v573, 0.0
    %v580 = vmax.f32 %v560, %v570
    %v581 = vmax.f32 %v561, %v572
    %v582 = vmax.f32 %v562, %v574
    %v583 = vmax.f32 %v563, %v579
    %588 = vrot.lane.b32.xlu0 %v580, 112
    %v589 = vpop.permute.xlu0 %588
    %590 = vrot.lane.b32.xlu0 %v581, 112
    %v591 = vpop.permute.xlu0 %590
    %592 = vrot.lane.b32.xlu0 %v582, 112
    %v593 = vpop.permute.xlu0 %592
    %594 = vrot.lane.b32.xlu0 %v583, 112
    %v595 = vpop.permute.xlu0 %594
    %vm600 = vcmask 916480
    %v601 = vsel %vm600, %v589, 0.0
    %v602 = vsel %vm600, %v591, 0.0
    %v603 = vsel %vm600, %v593, 0.0
    %v604 = vsel %vm600, %v595, 0.0
    %v605 = vmax.f32 %v580, %v601
    %v606 = vmax.f32 %v581, %v602
    %v607 = vmax.f32 %v582, %v603
    %v608 = vmax.f32 %v583, %v604
    %v609 = vld [vmem:[#allocation7] sm:$0xff]
    %v610 = vld [vmem:[#allocation7 + $0x8] sm:$0xff]
    %v611 = vld [vmem:[#allocation7 + $0x10] sm:$0xff]
    %v612 = vld [vmem:[#allocation7 + $0x18] sm:$0xff]
    %v613 = vld [vmem:[#allocation7 + $0x20] sm:$0xff]
    %v614 = vld [vmem:[#allocation7 + $0x28] sm:$0xff]
    %v615 = vld [vmem:[#allocation7 + $0x30] sm:$0xff]
    %v616 = vld [vmem:[#allocation7 + $0x38] sm:$0xff]
    %v617 = vld [vmem:[#allocation7 + $0x40] sm:$0xff]
    %v618 = vld [vmem:[#allocation7 + $0x48] sm:$0xff]
    %v619 = vld [vmem:[#allocation7 + $0x50] sm:$0xff]
    %v620 = vld [vmem:[#allocation7 + $0x58] sm:$0xff]
    %v621 = vld [vmem:[#allocation7 + $0x60] sm:$0xff]
    %v622 = vld [vmem:[#allocation7 + $0x68] sm:$0xff]
    %v623 = vld [vmem:[#allocation7 + $0x70] sm:$0xff]
    %v624 = vld [vmem:[#allocation7 + $0x78] sm:$0xff]
    %v625 = vld [vmem:[#allocation7 + $0x80] sm:$0xff]
    %v626 = vld [vmem:[#allocation7 + $0x88] sm:$0xff]
    %v627 = vld [vmem:[#allocation7 + $0x90] sm:$0xff]
    %v628 = vld [vmem:[#allocation7 + $0x98] sm:$0xff]
    %v629 = vld [vmem:[#allocation7 + $0xa0] sm:$0xff]
    %v630 = vld [vmem:[#allocation7 + $0xa8] sm:$0xff]
    %v631 = vld [vmem:[#allocation7 + $0xb0] sm:$0xff]
    %v632 = vld [vmem:[#allocation7 + $0xb8] sm:$0xff]
    %v633 = vld [vmem:[#allocation7 + $0xc0] sm:$0xff]
    %v634 = vld [vmem:[#allocation7 + $0xc8] sm:$0xff]
    %v635 = vld [vmem:[#allocation7 + $0xd0] sm:$0xff]
    %v636 = vld [vmem:[#allocation7 + $0xd8] sm:$0xff]
    %v637 = vld [vmem:[#allocation7 + $0xe0] sm:$0xff]
    %v638 = vld [vmem:[#allocation7 + $0xe8] sm:$0xff]
    %v639 = vld [vmem:[#allocation7 + $0xf0] sm:$0xff]
    %v640 = vld [vmem:[#allocation7 + $0xf8] sm:$0xff]
    %v641 = vld [vmem:[#allocation7 + $0x100] sm:$0xff]
    %v642 = vld [vmem:[#allocation7 + $0x108] sm:$0xff]
    %v643 = vld [vmem:[#allocation7 + $0x110] sm:$0xff]
    %v644 = vld [vmem:[#allocation7 + $0x118] sm:$0xff]
    %v645 = vld [vmem:[#allocation7 + $0x120] sm:$0xff]
    %v646 = vld [vmem:[#allocation7 + $0x128] sm:$0xff]
    %v647 = vld [vmem:[#allocation7 + $0x130] sm:$0xff]
    %v648 = vld [vmem:[#allocation7 + $0x138] sm:$0xff]
    %v649 = vld [vmem:[#allocation7 + $0x140] sm:$0xff]
    %v650 = vld [vmem:[#allocation7 + $0x148] sm:$0xff]
    %v651 = vld [vmem:[#allocation7 + $0x150] sm:$0xff]
    %v652 = vld [vmem:[#allocation7 + $0x158] sm:$0xff]
    %v653 = vld [vmem:[#allocation7 + $0x160] sm:$0xff]
    %v654 = vld [vmem:[#allocation7 + $0x168] sm:$0xff]
    %v655 = vld [vmem:[#allocation7 + $0x170] sm:$0xff]
    %v656 = vld [vmem:[#allocation7 + $0x178] sm:$0xff]
    %v657 = vld [vmem:[#allocation7 + $0x180] sm:$0xff]
    %v658 = vld [vmem:[#allocation7 + $0x188] sm:$0xff]
    %v659 = vld [vmem:[#allocation7 + $0x190] sm:$0xff]
    %v660 = vld [vmem:[#allocation7 + $0x198] sm:$0xff]
    %v661 = vld [vmem:[#allocation7 + $0x1a0] sm:$0xff]
    %v662 = vld [vmem:[#allocation7 + $0x1a8] sm:$0xff]
    %v663 = vld [vmem:[#allocation7 + $0x1b0] sm:$0xff]
    %v664 = vld [vmem:[#allocation7 + $0x1b8] sm:$0xff]
    %v665 = vld [vmem:[#allocation7 + $0x1c0] sm:$0xff]
    %v666 = vld [vmem:[#allocation7 + $0x1c8] sm:$0xff]
    %v667 = vld [vmem:[#allocation7 + $0x1d0] sm:$0xff]
    %v668 = vld [vmem:[#allocation7 + $0x1d8] sm:$0xff]
    %v669 = vld [vmem:[#allocation7 + $0x1e0] sm:$0xff]
    %v670 = vld [vmem:[#allocation7 + $0x1e8] sm:$0xff]
    %v671 = vld [vmem:[#allocation7 + $0x1f0] sm:$0xff]
    %v672 = vld [vmem:[#allocation7 + $0x1f8] sm:$0xff]
    %v673 = vld [vmem:[%s6] sm:$0x1]
    %v675 = vlaneseq
    %v676 = vshrl.u32 %v675, 7
    %v677 = vsub.s32 0, %v676
    %v678 = vrot.slane %v673, %v677
    %680 = vmatprep.subr.mxu0 0.0
    %681 = vmatpush1.msra.mxu0 %v624
    %682 = vmatprep.subr.mxu0 0.0
    %683 = vmatpush1.msra.mxu0 %v623
    %684 = vmatprep.subr.mxu0 0.0
    %685 = vmatpush1.msra.mxu0 %v622
    %686 = vmatprep.subr.mxu0 0.0
    %687 = vmatpush1.msra.mxu0 %v621
    %688 = vmatprep.subr.mxu0 0.0
    %689 = vmatpush1.msra.mxu0 %v620
    %690 = vmatprep.subr.mxu0 0.0
    %691 = vmatpush1.msra.mxu0 %v619
    %692 = vmatprep.subr.mxu0 0.0
    %693 = vmatpush1.msra.mxu0 %v618
    %694 = vmatprep.subr.mxu0 0.0
    %695 = vmatpush1.msra.mxu0 %v617
    %696 = vmatprep.subr.mxu0 0.0
    %697 = vmatpush1.msra.mxu0 %v616
    %698 = vmatprep.subr.mxu0 0.0
    %699 = vmatpush1.msra.mxu0 %v615
    %700 = vmatprep.subr.mxu0 0.0
    %701 = vmatpush1.msra.mxu0 %v614
    %702 = vmatprep.subr.mxu0 0.0
    %703 = vmatpush1.msra.mxu0 %v613
    %704 = vmatprep.subr.mxu0 0.0
    %705 = vmatpush1.msra.mxu0 %v612
    %706 = vmatprep.subr.mxu0 0.0
    %707 = vmatpush1.msra.mxu0 %v611
    %708 = vmatprep.subr.mxu0 0.0
    %709 = vmatpush1.msra.mxu0 %v610
    %710 = vmatprep.subr.mxu0 0.0
    %711 = vmatpush1.msra.mxu0 %v609
    %712 = vmatprep.subr.mxu0 0.0
    %713 = vmatpush2.msra.mxu0 %v640
    %714 = vmatprep.subr.mxu0 0.0
    %715 = vmatpush2.msra.mxu0 %v639
    %716 = vmatprep.subr.mxu0 0.0
    %717 = vmatpush2.msra.mxu0 %v638
    %718 = vmatprep.subr.mxu0 0.0
    %719 = vmatpush2.msra.mxu0 %v637
    %720 = vmatprep.subr.mxu0 0.0
    %721 = vmatpush2.msra.mxu0 %v636
    %722 = vmatprep.subr.mxu0 0.0
    %723 = vmatpush2.msra.mxu0 %v635
    %724 = vmatprep.subr.mxu0 0.0
    %725 = vmatpush2.msra.mxu0 %v634
    %726 = vmatprep.subr.mxu0 0.0
    %727 = vmatpush2.msra.mxu0 %v633
    %728 = vmatprep.subr.mxu0 0.0
    %729 = vmatpush2.msra.mxu0 %v632
    %730 = vmatprep.subr.mxu0 0.0
    %731 = vmatpush2.msra.mxu0 %v631
    %732 = vmatprep.subr.mxu0 0.0
    %733 = vmatpush2.msra.mxu0 %v630
    %734 = vmatprep.subr.mxu0 0.0
    %735 = vmatpush2.msra.mxu0 %v629
    %736 = vmatprep.subr.mxu0 0.0
    %737 = vmatpush2.msra.mxu0 %v628
    %738 = vmatprep.subr.mxu0 0.0
    %739 = vmatpush2.msra.mxu0 %v627
    %740 = vmatprep.subr.mxu0 0.0
    %741 = vmatpush2.msra.mxu0 %v626
    %742 = vmatprep.subr.mxu0 0.0
    %743 = vmatpush2.msra.mxu0 %v625
    %744 = vmatprep.mubr.f32.mxu0 %v606
    %745 = vmatmul.mubr.f32.gmra.mxu0 %v605
    %v746 = vpop.f32.mrf.mxu0
    %v747 = vadd.f32 %v678, %v746
    %v748 = vpop.f32.mrf.mxu0
    %749 = vdwg.mxu0
    %750 = vmatprep.subr.mxu0 0.0
    %751 = vmatpush1.msra.mxu0 %v656
    %752 = vmatprep.subr.mxu0 0.0
    %753 = vmatpush1.msra.mxu0 %v655
    %754 = vmatprep.subr.mxu0 0.0
    %755 = vmatpush1.msra.mxu0 %v654
    %756 = vmatprep.subr.mxu0 0.0
    %757 = vmatpush1.msra.mxu0 %v653
    %758 = vmatprep.subr.mxu0 0.0
    %759 = vmatpush1.msra.mxu0 %v652
    %760 = vmatprep.subr.mxu0 0.0
    %761 = vmatpush1.msra.mxu0 %v651
    %762 = vmatprep.subr.mxu0 0.0
    %763 = vmatpush1.msra.mxu0 %v650
    %764 = vmatprep.subr.mxu0 0.0
    %765 = vmatpush1.msra.mxu0 %v649
    %766 = vmatprep.subr.mxu0 0.0
    %767 = vmatpush1.msra.mxu0 %v648
    %768 = vmatprep.subr.mxu0 0.0
    %769 = vmatpush1.msra.mxu0 %v647
    %770 = vmatprep.subr.mxu0 0.0
    %771 = vmatpush1.msra.mxu0 %v646
    %772 = vmatprep.subr.mxu0 0.0
    %773 = vmatpush1.msra.mxu0 %v645
    %774 = vmatprep.subr.mxu0 0.0
    %775 = vmatpush1.msra.mxu0 %v644
    %776 = vmatprep.subr.mxu0 0.0
    %777 = vmatpush1.msra.mxu0 %v643
    %778 = vmatprep.subr.mxu0 0.0
    %779 = vmatpush1.msra.mxu0 %v642
    %780 = vmatprep.subr.mxu0 0.0
    %781 = vmatpush1.msra.mxu0 %v641
    %782 = vmatprep.subr.mxu0 0.0
    %783 = vmatpush2.msra.mxu0 %v672
    %784 = vmatprep.subr.mxu0 0.0
    %785 = vmatpush2.msra.mxu0 %v671
    %786 = vmatprep.subr.mxu0 0.0
    %787 = vmatpush2.msra.mxu0 %v670
    %788 = vmatprep.subr.mxu0 0.0
    %789 = vmatpush2.msra.mxu0 %v669
    %790 = vmatprep.subr.mxu0 0.0
    %791 = vmatpush2.msra.mxu0 %v668
    %792 = vmatprep.subr.mxu0 0.0
    %793 = vmatpush2.msra.mxu0 %v667
    %794 = vmatprep.subr.mxu0 0.0
    %795 = vmatpush2.msra.mxu0 %v666
    %796 = vmatprep.subr.mxu0 0.0
    %797 = vmatpush2.msra.mxu0 %v665
    %798 = vmatprep.subr.mxu0 0.0
    %799 = vmatpush2.msra.mxu0 %v664
    %800 = vmatprep.subr.mxu0 0.0
    %801 = vmatpush2.msra.mxu0 %v663
    %802 = vmatprep.subr.mxu0 0.0
    %803 = vmatpush2.msra.mxu0 %v662
    %804 = vmatprep.subr.mxu0 0.0
    %805 = vmatpush2.msra.mxu0 %v661
    %806 = vmatprep.subr.mxu0 0.0
    %807 = vmatpush2.msra.mxu0 %v660
    %808 = vmatprep.subr.mxu0 0.0
    %809 = vmatpush2.msra.mxu0 %v659
    %810 = vmatprep.subr.mxu0 0.0
    %811 = vmatpush2.msra.mxu0 %v658
    %812 = vmatprep.subr.mxu0 0.0
    %813 = vmatpush2.msra.mxu0 %v657
    %814 = vmatprep.mubr.f32.mxu0 %v608
    %815 = vmatmul.mubr.f32.gmra.mxu0 %v607
    %v816 = vpop.f32.mrf.mxu0
    %v817 = vadd.f32 %v747, %v816
    %v818 = vpop.f32.mrf.mxu0
    %819 = vdwg.mxu0
    %v820 = vmax.f32 %v817, 0.0
    %v821 = vld [vmem:[%s7] sm:$0xff]
    %v822 = vld [vmem:[%s7 + $0x8] sm:$0xff]
    %v823 = vld [vmem:[%s7 + $0x10] sm:$0xff]
    %v824 = vld [vmem:[%s7 + $0x18] sm:$0xff]
    %v825 = vld [vmem:[%s7 + $0x20] sm:$0xff]
    %v826 = vld [vmem:[%s7 + $0x28] sm:$0xff]
    %v827 = vld [vmem:[%s7 + $0x30] sm:$0xff]
    %v828 = vld [vmem:[%s7 + $0x38] sm:$0xff]
    %v829 = vld [vmem:[%s7 + $0x40] sm:$0xff]
    %v830 = vld [vmem:[%s7 + $0x48] sm:$0xff]
    %v831 = vld [vmem:[%s7 + $0x50] sm:$0xff]
    %v832 = vld [vmem:[%s7 + $0x58] sm:$0xff]
    %v833 = vld [vmem:[%s7 + $0x60] sm:$0xff]
    %v834 = vld [vmem:[%s7 + $0x68] sm:$0xff]
    %v835 = vld [vmem:[%s7 + $0x70] sm:$0xff]
    %v836 = vld [vmem:[%s7 + $0x78] sm:$0xff]
    %v837 = vld [vmem:[%s8] sm:$0x1]
    %v839 = vlaneseq
    %v840 = vshrl.u32 %v839, 7
    %v841 = vsub.s32 0, %v840
    %v842 = vrot.slane %v837, %v841
    %844 = vmatprep.subr.mxu0 0.0
    %845 = vmatpush1.msra.mxu0 %v836
    %846 = vmatprep.subr.mxu0 0.0
    %847 = vmatpush1.msra.mxu0 %v835
    %848 = vmatprep.subr.mxu0 0.0
    %849 = vmatpush1.msra.mxu0 %v834
    %850 = vmatprep.subr.mxu0 0.0
    %851 = vmatpush1.msra.mxu0 %v833
    %852 = vmatprep.subr.mxu0 0.0
    %853 = vmatpush1.msra.mxu0 %v832
    %854 = vmatprep.subr.mxu0 0.0
    %855 = vmatpush1.msra.mxu0 %v831
    %856 = vmatprep.subr.mxu0 0.0
    %857 = vmatpush1.msra.mxu0 %v830
    %858 = vmatprep.subr.mxu0 0.0
    %859 = vmatpush1.msra.mxu0 %v829
    %860 = vmatprep.subr.mxu0 0.0
    %861 = vmatpush1.msra.mxu0 %v828
    %862 = vmatprep.subr.mxu0 0.0
    %863 = vmatpush1.msra.mxu0 %v827
    %864 = vmatprep.subr.mxu0 0.0
    %865 = vmatpush1.msra.mxu0 %v826
    %866 = vmatprep.subr.mxu0 0.0
    %867 = vmatpush1.msra.mxu0 %v825
    %868 = vmatprep.subr.mxu0 0.0
    %869 = vmatpush1.msra.mxu0 %v824
    %870 = vmatprep.subr.mxu0 0.0
    %871 = vmatpush1.msra.mxu0 %v823
    %872 = vmatprep.subr.mxu0 0.0
    %873 = vmatpush1.msra.mxu0 %v822
    %874 = vmatprep.subr.mxu0 0.0
    %875 = vmatpush1.msra.mxu0 %v821
    %876 = vmatprep.subr.mxu0 0.0
    %877 = vmatpush2.msra.mxu0 0.0
    %878 = vmatprep.subr.mxu0 0.0
    %879 = vmatpush2.msra.mxu0 0.0
    %880 = vmatprep.subr.mxu0 0.0
    %881 = vmatpush2.msra.mxu0 0.0
    %882 = vmatprep.subr.mxu0 0.0
    %883 = vmatpush2.msra.mxu0 0.0
    %884 = vmatprep.subr.mxu0 0.0
    %885 = vmatpush2.msra.mxu0 0.0
    %886 = vmatprep.subr.mxu0 0.0
    %887 = vmatpush2.msra.mxu0 0.0
    %888 = vmatprep.subr.mxu0 0.0
    %889 = vmatpush2.msra.mxu0 0.0
    %890 = vmatprep.subr.mxu0 0.0
    %891 = vmatpush2.msra.mxu0 0.0
    %892 = vmatprep.subr.mxu0 0.0
    %893 = vmatpush2.msra.mxu0 0.0
    %894 = vmatprep.subr.mxu0 0.0
    %895 = vmatpush2.msra.mxu0 0.0
    %896 = vmatprep.subr.mxu0 0.0
    %897 = vmatpush2.msra.mxu0 0.0
    %898 = vmatprep.subr.mxu0 0.0
    %899 = vmatpush2.msra.mxu0 0.0
    %900 = vmatprep.subr.mxu0 0.0
    %901 = vmatpush2.msra.mxu0 0.0
    %902 = vmatprep.subr.mxu0 0.0
    %903 = vmatpush2.msra.mxu0 0.0
    %904 = vmatprep.subr.mxu0 0.0
    %905 = vmatpush2.msra.mxu0 0.0
    %906 = vmatprep.subr.mxu0 0.0
    %907 = vmatpush2.msra.mxu0 0.0
    %908 = vmatprep.mubr.f32.mxu0 0.0
    %909 = vmatmul.mubr.f32.gmra.mxu0 %v820
    %v910 = vpop.f32.mrf.mxu0
    %v911 = vadd.f32 %v842, %v910
    %v912 = vpop.f32.mrf.mxu0
    %913 = vdwg.mxu0
    %v914 = vmax.f32 %v911, 0.0
    %v915 = vld [vmem:[#allocation8] sm:$0xff]
    %v916 = vld [vmem:[#allocation8 + $0x8] sm:$0xff]
    %v917 = vld [vmem:[#allocation8 + $0x10] sm:$0xff]
    %v918 = vld [vmem:[#allocation8 + $0x18] sm:$0xff]
    %v919 = vld [vmem:[#allocation8 + $0x20] sm:$0xff]
    %v920 = vld [vmem:[#allocation8 + $0x28] sm:$0xff]
    %v921 = vld [vmem:[#allocation8 + $0x30] sm:$0xff]
    %v922 = vld [vmem:[#allocation8 + $0x38] sm:$0xff]
    %v923 = vld [vmem:[%s10] sm:$0x1]
    %v925 = vlaneseq
    %v926 = vshrl.u32 %v925, 7
    %v927 = vsub.s32 0, %v926
    %v928 = vrot.slane %v923, %v927
    %v931 = vsel %vm137, %v914, 0
    %933 = vmatprep.subr.mxu0 0.0
    %934 = vmatpush1.msra.mxu0 0.0
    %935 = vmatprep.subr.mxu0 0.0
    %936 = vmatpush1.msra.mxu0 0.0
    %937 = vmatprep.subr.mxu0 0.0
    %938 = vmatpush1.msra.mxu0 0.0
    %939 = vmatprep.subr.mxu0 0.0
    %940 = vmatpush1.msra.mxu0 0.0
    %941 = vmatprep.subr.mxu0 0.0
    %942 = vmatpush1.msra.mxu0 0.0
    %943 = vmatprep.subr.mxu0 0.0
    %944 = vmatpush1.msra.mxu0 0.0
    %945 = vmatprep.subr.mxu0 0.0
    %946 = vmatpush1.msra.mxu0 0.0
    %947 = vmatprep.subr.mxu0 0.0
    %948 = vmatpush1.msra.mxu0 0.0
    %949 = vmatprep.subr.mxu0 0.0
    %950 = vmatpush1.msra.mxu0 %v922
    %951 = vmatprep.subr.mxu0 0.0
    %952 = vmatpush1.msra.mxu0 %v921
    %953 = vmatprep.subr.mxu0 0.0
    %954 = vmatpush1.msra.mxu0 %v920
    %955 = vmatprep.subr.mxu0 0.0
    %956 = vmatpush1.msra.mxu0 %v919
    %957 = vmatprep.subr.mxu0 0.0
    %958 = vmatpush1.msra.mxu0 %v918
    %959 = vmatprep.subr.mxu0 0.0
    %960 = vmatpush1.msra.mxu0 %v917
    %961 = vmatprep.subr.mxu0 0.0
    %962 = vmatpush1.msra.mxu0 %v916
    %963 = vmatprep.subr.mxu0 0.0
    %964 = vmatpush1.msra.mxu0 %v915
    %965 = vmatprep.subr.mxu0 0.0
    %966 = vmatpush2.msra.mxu0 0.0
    %967 = vmatprep.subr.mxu0 0.0
    %968 = vmatpush2.msra.mxu0 0.0
    %969 = vmatprep.subr.mxu0 0.0
    %970 = vmatpush2.msra.mxu0 0.0
    %971 = vmatprep.subr.mxu0 0.0
    %972 = vmatpush2.msra.mxu0 0.0
    %973 = vmatprep.subr.mxu0 0.0
    %974 = vmatpush2.msra.mxu0 0.0
    %975 = vmatprep.subr.mxu0 0.0
    %976 = vmatpush2.msra.mxu0 0.0
    %977 = vmatprep.subr.mxu0 0.0
    %978 = vmatpush2.msra.mxu0 0.0
    %979 = vmatprep.subr.mxu0 0.0
    %980 = vmatpush2.msra.mxu0 0.0
    %981 = vmatprep.subr.mxu0 0.0
    %982 = vmatpush2.msra.mxu0 0.0
    %983 = vmatprep.subr.mxu0 0.0
    %984 = vmatpush2.msra.mxu0 0.0
    %985 = vmatprep.subr.mxu0 0.0
    %986 = vmatpush2.msra.mxu0 0.0
    %987 = vmatprep.subr.mxu0 0.0
    %988 = vmatpush2.msra.mxu0 0.0
    %989 = vmatprep.subr.mxu0 0.0
    %990 = vmatpush2.msra.mxu0 0.0
    %991 = vmatprep.subr.mxu0 0.0
    %992 = vmatpush2.msra.mxu0 0.0
    %993 = vmatprep.subr.mxu0 0.0
    %994 = vmatpush2.msra.mxu0 0.0
    %995 = vmatprep.subr.mxu0 0.0
    %996 = vmatpush2.msra.mxu0 0.0
    %997 = vmatprep.mubr.f32.mxu0 0.0
    %998 = vmatmul.mubr.f32.gmra.mxu0 %v931
    %v999 = vpop.f32.mrf.mxu0
    %v1000 = vadd.f32 %v928, %v999
    %v1001 = vpop.f32.mrf.mxu0
    %1002 = vdwg.mxu0
    %1003 = vst [vmem:[#allocation10] sm:$0x3] %v1000
    // Predicated region
    $region62: #{tpu_custom_call.1} parent=1 // pred_check
      _
    $region63: #{tpu_custom_call.1} parent=1 // pred_check_branch
      %1005 = sbr.rel (0) target = $region65
    $region64: #{tpu_custom_call.1} parent=1 // pred_region
      %s1007 = ssub.s32 32, 32
      %1008 = vsyncadd [#allocation4], %s1007
      %s1010 = sshll.u32 [#allocation10], 4
      %s1011 = int_to_ptr.vmem [resolvable:$true] %s1010
      %1013 = dma.vmem_to_hbm [thread:$0]  %s1011, 32, %s11, [#allocation4]
    $region65: #{tpu_custom_call.1} parent=1 // pred_fallthru
      _
    // Predicated region
    $region66: #{tpu_custom_call.1} parent=1 // pred_check
      _
    $region67: #{tpu_custom_call.1} parent=1 // pred_check_branch
      %1015 = sbr.rel (0) target = $region69
    $region68: #{tpu_custom_call.1} parent=1 // pred_region
      %1016 = dma.done [#allocation4], 32
    $region69: #{tpu_custom_call.1} parent=1 // pred_fallthru
      _
    %1017 = vsyncpa [#allocation3], 1
    %1018 = vsyncpa [#allocation6], 1
    %1019 = vsyncpa [#allocation9], 1
    %1020 = vsyncpa [#allocation4], 1

</llo_original>
